<compile_context>
chip_gen: v7x
topology: tpu7x:2x2x1
jax: 0.10.0
libtpu: 0.0.40
codegen_flags: <defaults>
</compile_context>

<pallas_src>
import functools

import jax
import jax.numpy as jnp
from jax.experimental import pallas as pl
from jax.experimental.pallas import tpu as pltpu


def _swish_kernel(x_ref, o_ref):
    x = x_ref[...]
    xf = x.astype(jnp.float32)          # f32 compute (mandatory on v5e VPU/EUP)
    o_ref[...] = (xf * jax.nn.sigmoid(xf)).astype(o_ref.dtype)


_LANE = 128            # lane-dense last dim, unmasked vst
_SUBLANE = 8           # (8, 128) tiling constraint
_MAX_TILE_ROWS = 8192  # 8192 x 128 x 4B = 4 MiB per f32 block (2 MiB bf16)
_MIN_SPLIT_ROWS = 2048 # only force a multi-block grid above ~1 MiB of rows


def _round_up(a, b):
    return -(-a // b) * b


@jax.jit
def swish(x):
    """Elementwise Swish via Pallas. Preserves input shape and dtype."""
    orig_shape = x.shape
    orig_dtype = x.dtype
    n = x.size
    if n == 0:
        return x

    rows = -(-n // _LANE)                 # rows of a (rows, 128) slab
    rows8 = _round_up(rows, _SUBLANE)     # respect (8, 128) tiling

    # Choose the number of grid steps: big inputs get >= 2 (even) blocks so
    # both TensorCores on v7x are busy; tiny inputs use a single block.
    if rows8 >= 2 * _MIN_SPLIT_ROWS:
        g = max(2, -(-rows8 // _MAX_TILE_ROWS))
        g += g & 1                        # even block count for 2-TC balance
    else:
        g = 1
    tile_rows = _round_up(-(-rows8 // g), _SUBLANE)   # <= _MAX_TILE_ROWS
    rows_padded = g * tile_rows
    n_padded = rows_padded * _LANE

    # Single pad, skipped entirely when the input already tiles cleanly.
    flat = x.reshape(-1)
    if n_padded != n:
        flat = jnp.pad(flat, (0, n_padded - n))       # swish(0) == 0, safe
    x2d = flat.reshape(rows_padded, _LANE)

    out2d = pl.pallas_call(
        _swish_kernel,
        out_shape=jax.ShapeDtypeStruct((rows_padded, _LANE), orig_dtype),
        grid_spec=pltpu.PrefetchScalarGridSpec(
            num_scalar_prefetch=0,
            grid=(g,),
            in_specs=[pl.BlockSpec((tile_rows, _LANE), lambda i: (i, 0))],
            out_specs=pl.BlockSpec((tile_rows, _LANE), lambda i: (i, 0)),
        ),
        compiler_params=pltpu.CompilerParams(
            dimension_semantics=("parallel",),
        ),
    )(x2d)

    if n_padded != n:
        return out2d.reshape(-1)[:n].reshape(orig_shape)
    return out2d.reshape(orig_shape)


if __name__ == "__main__":
    key = jax.random.PRNGKey(0)

    # NCHW-style input consistent with typical use of this activation.
    x = jax.random.normal(key, (2, 4, 16, 16), dtype=jnp.float32)
    y = jax.block_until_ready(swish(x))
    y_ref = x * jax.nn.sigmoid(x)
    assert y.shape == x.shape and y.dtype == x.dtype
    assert jnp.allclose(y, y_ref, atol=1e-6, rtol=1e-6)

    # Ragged shape to exercise the padded path.
    x2 = jax.random.normal(jax.random.PRNGKey(1), (3, 5, 7, 11), dtype=jnp.float32)
    y2 = jax.block_until_ready(swish(x2))
    y2_ref = x2 * jax.nn.sigmoid(x2)
    assert y2.shape == x2.shape and y2.dtype == x2.dtype
    assert jnp.allclose(y2, y2_ref, atol=1e-6, rtol=1e-6)

    print("KERNEL_OK")
</pallas_src>

<mosaic_0001>
module attributes {stable_mosaic.version = 11 : i64} {
  func.func @_swish_kernel(%arg0: i32, %arg1: memref<16x128xf32, #tpu.memory_space<vmem>>, %arg2: memref<16x128xf32, #tpu.memory_space<vmem>>) attributes {dimension_semantics = [#tpu.dimension_semantics<parallel>], iteration_bounds = array<i64: 1>, scalar_prefetch = 0 : i64, scratch_operands = 0 : i64, tpu.core_type = #tpu.core_type<tc>, window_params = [{transform_indices = @transform_0, window_bounds = array<i64: 16, 128>}, {transform_indices = @transform_1, window_bounds = array<i64: 16, 128>}]} {
    %c0 = arith.constant 0 : index
    %c0_0 = arith.constant 0 : index
    %0 = vector.load %arg1[%c0, %c0_0] : memref<16x128xf32, #tpu.memory_space<vmem>>, vector<16x128xf32>
    %1 = arith.negf %0 : vector<16x128xf32>
    %2 = math.exp %1 : vector<16x128xf32>
    %cst = arith.constant 1.000000e+00 : f32
    %3 = vector.broadcast %cst : f32 to vector<16x128xf32>
    %4 = arith.addf %3, %2 : vector<16x128xf32>
    %5 = arith.divf %3, %4 : vector<16x128xf32>
    %6 = arith.mulf %0, %5 : vector<16x128xf32>
    %c0_1 = arith.constant 0 : index
    %c0_2 = arith.constant 0 : index
    %7 = vector.load %arg2[%c0_1, %c0_2] : memref<16x128xf32, #tpu.memory_space<vmem>>, vector<16x128xf32>
    tpu.vector_store %arg2[%c0_1, %c0_2], %6 {strides = array<i32>} : memref<16x128xf32, #tpu.memory_space<vmem>>, vector<16x128xf32>,
    return
  }
  func.func @transform_0(%arg0: i32) -> (i32, i32) {
    %c0_i32 = arith.constant 0 : i32
    %c0_i32_0 = arith.constant 0 : i32
    return %arg0, %c0_i32 : i32, i32
  }
  func.func @transform_1(%arg0: i32) -> (i32, i32) {
    %c0_i32 = arith.constant 0 : i32
    %c0_i32_0 = arith.constant 0 : i32
    return %arg0, %c0_i32 : i32, i32
  }
}

</mosaic_0001>

<llo_original>
// kernel: swish.1
$region0: #{swish.1}
  #allocation0 [shape = 'u32[]', space=smem, size = 0x4, offset = 0x4, fixed_abs, tag = 'smem constant byte address 0x4 - core index']
  #allocation1 [shape = 'u32[144,128]{1,0:T(1,128)}', space=vmem, size = 0x12000, scoped, tag = 'internal scratch']
  %s0 = inlined_call_operand.vmem [shape: f32[16,128], index: 0, kind: input, shape index: {}]
  %s1 = inlined_call_operand.vmem [shape: f32[16,128], index: 1, kind: output, shape index: {}]
  %s2 = sld [smem:[#allocation0]]
  $region14: #{swish.1} parent=0
    _
  %s4 = ssub.s32 1, %s2
  %s5 = scalar_select 0, %s4, %s2
  // Predicated region
  $region2: #{swish.1} parent=0 // pred_check
    _
  $region3: #{swish.1} parent=0 // pred_check_branch
    %7 = sbr.rel (0) target = $region5
  $region4: #{swish.1} parent=0 // pred_region
    _
  $region5: #{swish.1} parent=0 // pred_fallthru
    _
  %v8 = vld [vmem:[%s0] sm:$0xff]
  %v9 = vld [vmem:[%s0 + $0x8] sm:$0xff]
  %v10 = vxor.u32 %v8, 2147483648
  %v11 = vxor.u32 %v9, 2147483648
  %v12 = vmul.f32 %v10, 1.442695
  %v13 = vpow.pop %v12
  %v14 = vmul.f32 %v11, 1.442695
  %v15 = vpow.pop %v14
  %v16 = vadd.f32 %v13, 1.0
  %v17 = vadd.f32 %v15, 1.0
  %v18 = vrcp.pop %v16
  %v19 = vmul.f32 1.0, %v18
  %v20 = vrcp.pop %v17
  %v21 = vmul.f32 1.0, %v20
  %v22 = vmul.f32 %v8, %v19
  %v23 = vmul.f32 %v9, %v21
  %24 = vst [vmem:[%s1] sm:$0xff] %v22
  %25 = vst [vmem:[%s1 + $0x8] sm:$0xff] %v23
  // Predicated region
  $region6: #{swish.1} parent=0 // pred_check
    _
  $region7: #{swish.1} parent=0 // pred_check_branch
    %27 = sbr.rel (0) target = $region9
  $region8: #{swish.1} parent=0 // pred_region
    _
  $region9: #{swish.1} parent=0 // pred_fallthru
    _
  // Predicated region
  $region10: #{swish.1} parent=0 // pred_check
    _
  $region11: #{swish.1} parent=0 // pred_check_branch
    %29 = sbr.rel (0) target = $region13
  $region12: #{swish.1} parent=0 // pred_region
    _
  $region13: #{swish.1} parent=0 // pred_fallthru
    _

</llo_original>
